<compile_context>
chip_gen: v6e
topology: v6e:2x2x1
jax: 0.10.0
libtpu: 0.0.40
codegen_flags: <defaults>
</compile_context>

<pallas_src>
import functools

import jax
import jax.numpy as jnp
from jax import lax
from jax.experimental import pallas as pl
from jax.experimental.pallas import tpu as pltpu


def _round_up(a, b):
    return (a + b - 1) // b * b


def _sublane_multiple(dtype):
    """Second-minor tile multiple per dtype (f32: 8, bf16: 16, int8/fp8: 32)."""
    itemsize = jnp.dtype(dtype).itemsize
    return max(8, 32 // max(itemsize, 1))


def _vmem_budget_bytes():
    """~85% of physical VMEM (leaves headroom for Mosaic internal scratch)."""
    cap = None
    try:
        cap = getattr(pltpu.get_tpu_info(), "vmem_capacity_bytes", None)
    except Exception:
        cap = None
    if not cap:
        cap = 64 * 1024 * 1024          # conservative fallback (v7x physical)
    return int(cap * 0.85)


def _linear_layer_kernel(x_ref, gamma_ref, beta_ref, w_ref, b_ref, o_ref,
                         acc_ref, *xn_refs, eps, use_ln, use_relu,
                         inv_d_in, tk, nk):
    """One (row-tile i, out-col-tile j, K-tile k) grid step.

    use_ln=True : x_ref is the full (tm, d_in_p) row tile (block index constant
                  across j and k); LayerNorm runs once per row tile and is
                  cached in the (nk, tm, tk) xn scratch.
    use_ln=False: x_ref is a (tm, tk) K-slice streamed by the pipeline.
    acc_ref     : (tm, tn) float32 accumulator, persists across the K axis.
    """
    j = pl.program_id(1)
    k = pl.program_id(2)

    if use_ln:
        xn_ref = xn_refs[0]

        @pl.when(jnp.logical_and(j == 0, k == 0))
        def _():
            tm = x_ref.shape[0]
            s1 = jnp.zeros((tm, 1), jnp.float32)
            s2 = jnp.zeros((tm, 1), jnp.float32)
            # Fused one-pass statistics, chunked so f32 temporaries stay (tm, tk).
            # Padded K columns are zero, so dividing by the true D_in is exact.
            for kk in range(nk):
                xc = x_ref[:, kk * tk:(kk + 1) * tk].astype(jnp.float32)
                s1 = s1 + jnp.sum(xc, axis=-1, keepdims=True)
                s2 = s2 + jnp.sum(xc * xc, axis=-1, keepdims=True)
            mean = s1 * inv_d_in
            var = jnp.maximum(s2 * inv_d_in - mean * mean, 0.0)
            inv_std = lax.rsqrt(var + eps)
            for kk in range(nk):
                xc = x_ref[:, kk * tk:(kk + 1) * tk].astype(jnp.float32)
                g = gamma_ref[:, kk * tk:(kk + 1) * tk]
                b = beta_ref[:, kk * tk:(kk + 1) * tk]
                xn_ref[kk] = ((xc - mean) * inv_std * g + b).astype(xn_ref.dtype)

        x_blk = xn_ref[k]            # (tm, tk): dynamic index on the first axis
    else:
        x_blk = x_ref[...]           # (tm, tk) K-slice straight from the pipeline

    # TODO(synk): dropout is identity here (eval mode); training-mode dropout
    # would need pltpu.prng_seed / prng_random_bits masking before the matmul.

    @pl.when(k == 0)
    def _():
        acc_ref[...] = jnp.zeros_like(acc_ref)

    # MXU matmul in the operands' native dtype (bf16 stays bf16), f32 accumulation.
    acc_ref[...] += jnp.dot(x_blk, w_ref[...], preferred_element_type=jnp.float32)

    @pl.when(k == nk - 1)
    def _():
        y = acc_ref[...] + b_ref[...]
        if use_relu:
            y = jnp.maximum(y, 0.0)
        o_ref[...] = y.astype(o_ref.dtype)


def linear_layer_forward(x, gamma, beta, weight, bias, *,
                         layer_norm=True, relu=True, eps=1e-5,
                         row_tile=1024, col_tile=512, compute_dtype=None):
    """x: (N, L, D_in) -> (N, L, D_out). weight: (D_in, D_out) (torch weight.T)."""
    N, L, D_in = x.shape
    D_out = weight.shape[1]
    rows = N * L
    cdt = jnp.dtype(compute_dtype) if compute_dtype is not None else jnp.dtype(weight.dtype)
    out_dtype = x.dtype

    # --- K (D_in) tiling: caps the double-buffered weight block at 2*tk*tn ----
    d_in_p = _round_up(D_in, 128)
    if d_in_p <= 1024:
        tk = d_in_p
    else:
        tk = 128
        for cand in (512, 384, 256, 128):
            if d_in_p % cand == 0:
                tk = cand
                break
    nk = d_in_p // tk

    # --- output-column tiling: multiples of 128 for lane-dense stores --------
    tn = min(_round_up(col_tile, 128), _round_up(D_out, 128))

    # --- row tiling under the chip's VMEM budget ------------------------------
    sub = max(_sublane_multiple(cdt), _sublane_multiple(out_dtype))
    budget = _vmem_budget_bytes()
    c_item = jnp.dtype(cdt).itemsize
    o_item = jnp.dtype(out_dtype).itemsize

    def vmem_need(tm_, tn_):
        need = 2 * tk * tn_ * c_item                 # weight (double-buffered)
        need += tm_ * tn_ * 4                        # f32 accumulator scratch
        need += tm_ * tn_ * 4                        # matmul temporary
        need += 2 * tm_ * tn_ * o_item               # output (double-buffered)
        need += 2 * tn_ * 4 + 4 * d_in_p * 4         # bias + gamma/beta
        if layer_norm:
            need += 2 * tm_ * d_in_p * c_item        # full-row x block
            need += tm_ * d_in_p * c_item            # xn scratch
            need += 3 * tm_ * tk * 4                 # LN f32 temporaries
        else:
            need += 2 * tm_ * tk * c_item            # K-sliced x block
        return need

    tm = _round_up(min(row_tile, max(rows, 1)), sub)
    while vmem_need(tm, tn) > budget:
        if tm > 512 and tm >= 2 * sub:
            tm = _round_up(tm // 2, sub)
        elif tn > 128:
            tn -= 128
        elif tm >= 2 * sub:
            tm = _round_up(tm // 2, sub)
        else:
            break

    # v7x megacore: make sure the "parallel" row axis has >= 2 tiles to split.
    if rows > sub and _round_up(rows, tm) // tm < 2:
        tm = _round_up(-(-rows // 2), sub)

    rows_p = _round_up(rows, tm)
    d_out_p = _round_up(D_out, tn)

    # --- wrapper-side padding / invariant pre-casting (hoisted out of grid) ---
    x2 = x.reshape(rows, D_in).astype(cdt)
    pad_r, pad_k, pad_n = rows_p - rows, d_in_p - D_in, d_out_p - D_out
    if pad_r or pad_k:
        x2 = jnp.pad(x2, ((0, pad_r), (0, pad_k)))
    w2 = weight.astype(cdt)
    if pad_k or pad_n:
        w2 = jnp.pad(w2, ((0, pad_k), (0, pad_n)))
    gamma2 = gamma.reshape(1, D_in).astype(jnp.float32)
    beta2 = beta.reshape(1, D_in).astype(jnp.float32)
    if pad_k:
        gamma2 = jnp.pad(gamma2, ((0, 0), (0, pad_k)))
        beta2 = jnp.pad(beta2, ((0, 0), (0, pad_k)))
    bias2 = bias.reshape(1, D_out).astype(jnp.float32)
    if pad_n:
        bias2 = jnp.pad(bias2, ((0, 0), (0, pad_n)))

    kernel = functools.partial(
        _linear_layer_kernel, eps=float(eps), use_ln=bool(layer_norm),
        use_relu=bool(relu), inv_d_in=1.0 / float(D_in), tk=tk, nk=nk)

    grid = (rows_p // tm, d_out_p // tn, nk)

    if layer_norm:
        x_spec = pl.BlockSpec((tm, d_in_p), lambda i, j, k: (i, 0))
        scratch = [pltpu.VMEM((tm, tn), jnp.float32),
                   pltpu.VMEM((nk, tm, tk), cdt)]
    else:
        x_spec = pl.BlockSpec((tm, tk), lambda i, j, k: (i, k))
        scratch = [pltpu.VMEM((tm, tn), jnp.float32)]

    cost = pl.CostEstimate(
        flops=int(2 * rows_p * d_in_p * d_out_p),
        transcendentals=int(rows_p if layer_norm else 0),
        bytes_accessed=int(rows_p * d_in_p * c_item
                           + (rows_p // tm) * d_in_p * d_out_p * c_item
                           + rows_p * d_out_p * o_item))

    out2 = pl.pallas_call(
        kernel,
        out_shape=jax.ShapeDtypeStruct((rows_p, d_out_p), out_dtype),
        grid_spec=pltpu.PrefetchScalarGridSpec(
            num_scalar_prefetch=0,
            grid=grid,
            in_specs=[
                x_spec,                                              # x row tile
                pl.BlockSpec((1, d_in_p), lambda i, j, k: (0, 0)),   # gamma
                pl.BlockSpec((1, d_in_p), lambda i, j, k: (0, 0)),   # beta
                pl.BlockSpec((tk, tn), lambda i, j, k: (k, j)),      # weight tile
                pl.BlockSpec((1, tn), lambda i, j, k: (0, j)),       # bias tile
            ],
            out_specs=pl.BlockSpec((tm, tn), lambda i, j, k: (i, j)),
            scratch_shapes=scratch,
        ),
        compiler_params=pltpu.CompilerParams(
            # Row axis shards across TensorCores (megacore); the j and k axes
            # must stay sequential because the LN cache and the accumulator are
            # reused across them.
            dimension_semantics=("parallel", "arbitrary", "arbitrary"),
            vmem_limit_bytes=budget,
        ),
        cost_estimate=cost,
    )(x2, gamma2, beta2, w2, bias2)

    return out2[:rows, :D_out].reshape(N, L, D_out)


def _reference(x, gamma, beta, weight, bias, *, layer_norm=True, relu=True,
               eps=1e-5):
    cdt = jnp.dtype(weight.dtype)
    xf = x.astype(cdt).astype(jnp.float32)
    wf = weight.astype(jnp.float32)
    if layer_norm:
        mean = jnp.mean(xf, axis=-1, keepdims=True)
        var = jnp.mean((xf - mean) ** 2, axis=-1, keepdims=True)
        xf = (xf - mean) * lax.rsqrt(var + eps)
        xf = xf * gamma.astype(jnp.float32) + beta.astype(jnp.float32)
    y = jnp.dot(xf, wf, precision=lax.Precision.HIGHEST) + bias.astype(jnp.float32)
    if relu:
        y = jnp.maximum(y, 0.0)
    return y.astype(x.dtype)


def _run_case(key, N, L, in_hsz, out_hsz, *, layer_norm=True, relu=True,
              row_tile=1024, col_tile=512, weight_dtype=jnp.float32,
              atol=1e-4, rtol=1e-4):
    kx, kw, kb = jax.random.split(key, 3)
    x = jax.random.normal(kx, (N, L, in_hsz), dtype=jnp.float32)
    gamma = jnp.ones((in_hsz,), dtype=jnp.float32)             # nn.LayerNorm weight
    beta = jnp.zeros((in_hsz,), dtype=jnp.float32)             # nn.LayerNorm bias
    # nn.Linear(in, out): torch weight is (out, in); stored transposed here.
    weight = (jax.random.normal(kw, (in_hsz, out_hsz), dtype=jnp.float32)
              / jnp.sqrt(in_hsz)).astype(weight_dtype)
    bias = jax.random.normal(kb, (out_hsz,), dtype=jnp.float32) * 0.01

    out = linear_layer_forward(x, gamma, beta, weight, bias,
                               layer_norm=layer_norm, relu=relu,
                               row_tile=row_tile, col_tile=col_tile)
    out = jax.block_until_ready(out)
    ref = _reference(x, gamma, beta, weight, bias,
                     layer_norm=layer_norm, relu=relu)
    assert out.shape == (N, L, out_hsz)
    assert out.dtype == x.dtype
    err = jnp.max(jnp.abs(out.astype(jnp.float32) - ref.astype(jnp.float32)))
    assert jnp.allclose(out, ref, atol=atol, rtol=rtol), f"mismatch (max abs err {err})"


if __name__ == "__main__":
    key = jax.random.PRNGKey(0)
    k1, k2, k3, k4, k5 = jax.random.split(key, 5)

    # Small (N, L, D) case: D_in padded 32->128, 16 rows split into 2 row tiles
    # (megacore), single K step.
    _run_case(k1, N=2, L=8, in_hsz=32, out_hsz=64)

    # Multiple row and output-column tiles reusing the cached LayerNorm scratch.
    _run_case(k2, N=2, L=100, in_hsz=128, out_hsz=320, row_tile=64, col_tile=128)

    # K-tiled path: D_in=1200 padded to 1280, tk=256, nk=5 accumulation steps.
    _run_case(k3, N=2, L=64, in_hsz=1200, out_hsz=384, atol=2e-4, rtol=2e-4)

    # No LayerNorm / no ReLU: x streamed in (tm, tk) K slices, no LN scratch.
    _run_case(k4, N=1, L=16, in_hsz=1536, out_hsz=256, layer_norm=False,
              relu=False, atol=2e-4, rtol=2e-4)

    # bf16 weights: x cast to bf16 in the wrapper, LN math in f32, MXU bf16 path.
    _run_case(k5, N=2, L=16, in_hsz=128, out_hsz=256,
              weight_dtype=jnp.bfloat16, atol=3e-2, rtol=3e-2)

    print("KERNEL_OK")
</pallas_src>

<mosaic_0001>
module attributes {stable_mosaic.version = 11 : i64} {
  func.func @_linear_layer_kernel(%arg0: i32, %arg1: i32, %arg2: i32, %arg3: memref<8x128xf32, #tpu.memory_space<vmem>>, %arg4: memref<1x128xf32, #tpu.memory_space<vmem>>, %arg5: memref<1x128xf32, #tpu.memory_space<vmem>>, %arg6: memref<128x128xf32, #tpu.memory_space<vmem>>, %arg7: memref<1x128xf32, #tpu.memory_space<vmem>>, %arg8: memref<8x128xf32, #tpu.memory_space<vmem>>, %arg9: memref<8x128xf32, #tpu.memory_space<vmem>>, %arg10: memref<1x8x128xf32, #tpu.memory_space<vmem>>) attributes {dimension_semantics = [#tpu.dimension_semantics<parallel>, #tpu.dimension_semantics<arbitrary>, #tpu.dimension_semantics<arbitrary>], iteration_bounds = array<i64: 2, 1, 1>, scalar_prefetch = 0 : i64, scratch_operands = 2 : i64, tpu.core_type = #tpu.core_type<tc>, window_params = [{transform_indices = @transform_0, window_bounds = array<i64: 8, 128>}, {pipeline_mode = #tpu.pipeline_mode<synchronous>, transform_indices = @transform_1, window_bounds = array<i64: 1, 128>}, {pipeline_mode = #tpu.pipeline_mode<synchronous>, transform_indices = @transform_2, window_bounds = array<i64: 1, 128>}, {transform_indices = @transform_3, window_bounds = array<i64: 128, 128>}, {transform_indices = @transform_4, window_bounds = array<i64: 1, 128>}, {transform_indices = @transform_5, window_bounds = array<i64: 8, 128>}]} {
    %c0_i32 = arith.constant 0 : i32
    %0 = arith.cmpi eq, %arg1, %c0_i32 : i32
    %c0_i32_0 = arith.constant 0 : i32
    %1 = arith.cmpi eq, %arg2, %c0_i32_0 : i32
    %2 = arith.andi %0, %1 : i1
    %3 = arith.extui %2 : i1 to i32
    %c0_i32_1 = arith.constant 0 : i32
    %4 = arith.cmpi ne, %3, %c0_i32_1 : i32
    scf.if %4 {
      %cst_13 = arith.constant 0.000000e+00 : f32
      %19 = vector.broadcast %cst_13 : f32 to vector<8x1xf32>
      %cst_14 = arith.constant 0.000000e+00 : f32
      %20 = vector.broadcast %cst_14 : f32 to vector<8x1xf32>
      %c0_15 = arith.constant 0 : index
      %c0_16 = arith.constant 0 : index
      %21 = vector.load %arg3[%c0_15, %c0_16] : memref<8x128xf32, #tpu.memory_space<vmem>>, vector<8x128xf32>
      %cst_17 = arith.constant dense<0.000000e+00> : vector<8xf32>
      %22 = vector.multi_reduction <add>, %21, %cst_17 [1] : vector<8x128xf32> to vector<8xf32>
      %23 = vector.shape_cast %22 : vector<8xf32> to vector<8x1xf32>
      %24 = arith.addf %19, %23 : vector<8x1xf32>
      %25 = arith.mulf %21, %21 : vector<8x128xf32>
      %cst_18 = arith.constant dense<0.000000e+00> : vector<8xf32>
      %26 = vector.multi_reduction <add>, %25, %cst_18 [1] : vector<8x128xf32> to vector<8xf32>
      %27 = vector.shape_cast %26 : vector<8xf32> to vector<8x1xf32>
      %28 = arith.addf %20, %27 : vector<8x1xf32>
      %cst_19 = arith.constant 3.125000e-02 : f32
      %29 = vector.broadcast %cst_19 : f32 to vector<8x1xf32>
      %30 = arith.mulf %24, %29 : vector<8x1xf32>
      %cst_20 = arith.constant 3.125000e-02 : f32
      %31 = vector.broadcast %cst_20 : f32 to vector<8x1xf32>
      %32 = arith.mulf %28, %31 : vector<8x1xf32>
      %33 = arith.mulf %30, %30 : vector<8x1xf32>
      %34 = arith.subf %32, %33 : vector<8x1xf32>
      %cst_21 = arith.constant 0.000000e+00 : f32
      %35 = vector.broadcast %cst_21 : f32 to vector<8x1xf32>
      %36 = arith.maximumf %34, %35 : vector<8x1xf32>
      %cst_22 = arith.constant 9.99999974E-6 : f32
      %37 = vector.broadcast %cst_22 : f32 to vector<8x1xf32>
      %38 = arith.addf %36, %37 : vector<8x1xf32>
      %39 = math.rsqrt %38 : vector<8x1xf32>
      %c0_23 = arith.constant 0 : index
      %c0_24 = arith.constant 0 : index
      %40 = vector.load %arg3[%c0_23, %c0_24] : memref<8x128xf32, #tpu.memory_space<vmem>>, vector<8x128xf32>
      %c0_25 = arith.constant 0 : index
      %c0_26 = arith.constant 0 : index
      %41 = vector.load %arg4[%c0_25, %c0_26] : memref<1x128xf32, #tpu.memory_space<vmem>>, vector<1x128xf32>
      %c0_27 = arith.constant 0 : index
      %c0_28 = arith.constant 0 : index
      %42 = vector.load %arg5[%c0_27, %c0_28] : memref<1x128xf32, #tpu.memory_space<vmem>>, vector<1x128xf32>
      %43 = vector.broadcast %30 : vector<8x1xf32> to vector<8x128xf32>
      %44 = arith.subf %40, %43 : vector<8x128xf32>
      %45 = vector.broadcast %39 : vector<8x1xf32> to vector<8x128xf32>
      %46 = arith.mulf %44, %45 : vector<8x128xf32>
      %47 = vector.broadcast %41 : vector<1x128xf32> to vector<8x128xf32>
      %48 = arith.mulf %46, %47 : vector<8x128xf32>
      %49 = vector.broadcast %42 : vector<1x128xf32> to vector<8x128xf32>
      %50 = arith.addf %48, %49 : vector<8x128xf32>
      %c0_29 = arith.constant 0 : index
      %c0_30 = arith.constant 0 : index
      %c0_31 = arith.constant 0 : index
      %51 = vector.load %arg10[%c0_29, %c0_30, %c0_31] : memref<1x8x128xf32, #tpu.memory_space<vmem>>, vector<1x8x128xf32>
      %52 = vector.shape_cast %51 : vector<1x8x128xf32> to vector<8x128xf32>
      %53 = vector.shape_cast %50 : vector<8x128xf32> to vector<1x8x128xf32>
      tpu.vector_store %arg10[%c0_29, %c0_30, %c0_31], %53 {strides = array<i32>} : memref<1x8x128xf32, #tpu.memory_space<vmem>>, vector<1x8x128xf32>,
    } else {
    }
    %5 = arith.index_cast %arg2 : i32 to index
    %c0 = arith.constant 0 : index
    %c0_2 = arith.constant 0 : index
    %6 = vector.load %arg10[%5, %c0, %c0_2] : memref<1x8x128xf32, #tpu.memory_space<vmem>>, vector<1x8x128xf32>
    %7 = vector.shape_cast %6 : vector<1x8x128xf32> to vector<8x128xf32>
    %c0_i32_3 = arith.constant 0 : i32
    %8 = arith.cmpi eq, %arg2, %c0_i32_3 : i32
    %9 = arith.extui %8 : i1 to i32
    %c0_i32_4 = arith.constant 0 : i32
    %10 = arith.cmpi ne, %9, %c0_i32_4 : i32
    scf.if %10 {
      %cst_13 = arith.constant 0.000000e+00 : f32
      %19 = vector.broadcast %cst_13 : f32 to vector<8x128xf32>
      %c0_14 = arith.constant 0 : index
      %c0_15 = arith.constant 0 : index
      %20 = vector.load %arg9[%c0_14, %c0_15] : memref<8x128xf32, #tpu.memory_space<vmem>>, vector<8x128xf32>
      tpu.vector_store %arg9[%c0_14, %c0_15], %19 {strides = array<i32>} : memref<8x128xf32, #tpu.memory_space<vmem>>, vector<8x128xf32>,
    } else {
    }
    %c0_5 = arith.constant 0 : index
    %c0_6 = arith.constant 0 : index
    %11 = vector.load %arg9[%c0_5, %c0_6] : memref<8x128xf32, #tpu.memory_space<vmem>>, vector<8x128xf32>
    %c0_7 = arith.constant 0 : index
    %c0_8 = arith.constant 0 : index
    %12 = vector.load %arg6[%c0_7, %c0_8] : memref<128x128xf32, #tpu.memory_space<vmem>>, vector<128x128xf32>
    %cst = arith.constant dense<0.000000e+00> : vector<8x128xf32>
    %13 = tpu.matmul %7, %12, %cst {dimension_numbers = #tpu.dot_dimension_numbers<[1], [0], [0], [1], [0, 0, 1, 1], [], []>} : vector<8x128xf32>, vector<128x128xf32>, vector<8x128xf32> -> vector<8x128xf32>
    %14 = arith.addf %11, %13 : vector<8x128xf32>
    %c0_9 = arith.constant 0 : index
    %c0_10 = arith.constant 0 : index
    %15 = vector.load %arg9[%c0_9, %c0_10] : memref<8x128xf32, #tpu.memory_space<vmem>>, vector<8x128xf32>
    tpu.vector_store %arg9[%c0_9, %c0_10], %14 {strides = array<i32>} : memref<8x128xf32, #tpu.memory_space<vmem>>, vector<8x128xf32>,
    %c0_i32_11 = arith.constant 0 : i32
    %16 = arith.cmpi eq, %arg2, %c0_i32_11 : i32
    %17 = arith.extui %16 : i1 to i32
    %c0_i32_12 = arith.constant 0 : i32
    %18 = arith.cmpi ne, %17, %c0_i32_12 : i32
    scf.if %18 {
      %c0_13 = arith.constant 0 : index
      %c0_14 = arith.constant 0 : index
      %19 = vector.load %arg9[%c0_13, %c0_14] : memref<8x128xf32, #tpu.memory_space<vmem>>, vector<8x128xf32>
      %c0_15 = arith.constant 0 : index
      %c0_16 = arith.constant 0 : index
      %20 = vector.load %arg7[%c0_15, %c0_16] : memref<1x128xf32, #tpu.memory_space<vmem>>, vector<1x128xf32>
      %21 = vector.broadcast %20 : vector<1x128xf32> to vector<8x128xf32>
      %22 = arith.addf %19, %21 : vector<8x128xf32>
      %cst_17 = arith.constant 0.000000e+00 : f32
      %23 = vector.broadcast %cst_17 : f32 to vector<8x128xf32>
      %24 = arith.maximumf %22, %23 : vector<8x128xf32>
      %c0_18 = arith.constant 0 : index
      %c0_19 = arith.constant 0 : index
      %25 = vector.load %arg8[%c0_18, %c0_19] : memref<8x128xf32, #tpu.memory_space<vmem>>, vector<8x128xf32>
      tpu.vector_store %arg8[%c0_18, %c0_19], %24 {strides = array<i32>} : memref<8x128xf32, #tpu.memory_space<vmem>>, vector<8x128xf32>,
    } else {
    }
    return
  }
  func.func @transform_0(%arg0: i32, %arg1: i32, %arg2: i32) -> (i32, i32) {
    %c0_i32 = arith.constant 0 : i32
    %c0_i32_0 = arith.constant 0 : i32
    return %arg0, %c0_i32 : i32, i32
  }
  func.func @transform_1(%arg0: i32, %arg1: i32, %arg2: i32) -> (i32, i32) {
    %c0_i32 = arith.constant 0 : i32
    %c0_i32_0 = arith.constant 0 : i32
    %c0_i32_1 = arith.constant 0 : i32
    return %c0_i32, %c0_i32_0 : i32, i32
  }
  func.func @transform_2(%arg0: i32, %arg1: i32, %arg2: i32) -> (i32, i32) {
    %c0_i32 = arith.constant 0 : i32
    %c0_i32_0 = arith.constant 0 : i32
    %c0_i32_1 = arith.constant 0 : i32
    return %c0_i32, %c0_i32_0 : i32, i32
  }
  func.func @transform_3(%arg0: i32, %arg1: i32, %arg2: i32) -> (i32, i32) {
    %c0_i32 = arith.constant 0 : i32
    return %arg2, %arg1 : i32, i32
  }
  func.func @transform_4(%arg0: i32, %arg1: i32, %arg2: i32) -> (i32, i32) {
    %c0_i32 = arith.constant 0 : i32
    %c0_i32_0 = arith.constant 0 : i32
    return %c0_i32, %arg1 : i32, i32
  }
  func.func @transform_5(%arg0: i32, %arg1: i32, %arg2: i32) -> (i32, i32) {
    %c0_i32 = arith.constant 0 : i32
    return %arg0, %arg1 : i32, i32
  }
}

</mosaic_0001>

<llo_original>
// kernel: tpu_custom_call.1
$region0: #{tpu_custom_call.1}
  #allocation0 [shape = 'u32[]', space=smem, size = 0x4, offset = 0x4, fixed_abs, tag = 'smem constant byte address 0x4 - core index']
  #allocation1 [shape = 'u32[144,128]{1,0:T(1,128)}', space=vmem, size = 0x12000, scoped, tag = 'internal scratch']
  #allocation2 [shape = 'f32[8,128]{1,0:T(8,128)}', space=vmem, size = 0x1000, scoped, tag = 'scratch operand']
  #allocation3 [shape = 'f32[1,8,128]{2,1,0:T(8,128)}', space=vmem, size = 0x1000, scoped, tag = 'scratch operand']
  %s0 = inlined_call_operand.hbm [shape: f32[16,128], index: 0, kind: input, shape index: {}]
  %s1 = inlined_call_operand.vmem [shape: f32[1,128], index: 1, kind: input, shape index: {}]
  %s2 = inlined_call_operand.vmem [shape: f32[1,128], index: 2, kind: input, shape index: {}]
  %s3 = inlined_call_operand.hbm [shape: f32[128,128], index: 3, kind: input, shape index: {}]
  %s4 = inlined_call_operand.vmem [shape: f32[1,128], index: 4, kind: input, shape index: {}]
  %s5 = inlined_call_operand.hbm [shape: f32[16,128], index: 5, kind: output, shape index: {}]
  %s6 = sld [smem:[#allocation0]]
  $region73: #{tpu_custom_call.1} parent=0
    _
  %s8 = ssub.s32 1, %s6
  %s9 = scalar_select 0, %s8, %s6
  $region1: #{tpu_custom_call.1} parent=0
    #allocation4 [shape = 'u8[8192]{0}', space=vmem, size = 0x2000, scoped, tag = 'input window, operand 0']
    #allocation5 [shape = 's32[2]{0}', space=sflag, size = 0x8, scoped, tag = 'scoped memory for tpu_custom_call.1']
    #allocation6 [shape = 's32[2]{0}', space=sflag, size = 0x8, scoped, tag = 'scoped memory for tpu_custom_call.1']
    #allocation7 [shape = 'u8[65536]{0}', space=vmem, size = 0x10000, scoped, tag = 'input window, operand 3, single buffered']
    #allocation8 [shape = 's32[1]{0}', space=sflag, size = 0x4, scoped, tag = 'scoped memory for tpu_custom_call.1']
    #allocation9 [shape = 'u8[8192]{0}', space=vmem, size = 0x2000, scoped, tag = 'output window, operand 0']
    %10 = vsyncpa [#allocation5], 0
    %s11 = scalar_lea.sflag [#allocation5], 1
    %12 = vsyncpa %s11, 0
    %13 = vsyncpa [#allocation8], 0
    %14 = vsyncpa [#allocation6], 0
    %s15 = scalar_lea.sflag [#allocation6], 1
    %16 = vsyncpa %s15, 0
    loop: start=0, step=1, limit=4
    $region2: #{tpu_custom_call.1} parent=1 // loop_pre_header
      _
    $region3: #{tpu_custom_call.1} parent=1 // loop_header
      %s18 = sphi 0, %s22
      %p19 = scmp.ge.s32.totalorder %s18, 4
      %s25 = sphi 0, %s44
      %s26 = sphi 0, %s40
      %s27 = sphi 0, %s36
      %s28 = sphi 0, %s25
      %s29 = sphi 0, %s26
      %s30 = sphi 0, %s27
      %s31 = sphi 0, %s28
      %s32 = sphi 0, %s29
      %s33 = sphi 0, %s30
      %s47 = sphi 0, %s49
      %s50 = sphi 0, %s47
      %s51 = sphi 0, %s50
      %s67 = sphi 0, %s51
      %s71 = sphi 0, %s71
      %s73 = sphi 0, %s71
      %s74 = sphi 0, %s73
      %s88 = sphi 0, %s74
      %s92 = sphi 0, %s92
      %s94 = sphi 0, %s92
      %s95 = sphi 0, %s94
      %s109 = sphi 0, %s95
      %s117 = sphi 0, %s119
      %s120 = sphi 0, %s117
      %s121 = sphi 0, %s120
      %s137 = sphi 0, %s121
      %s143 = sphi 0, %s145
      %s146 = sphi 0, %s143
      %s147 = sphi 0, %s146
      %s163 = sphi 0, %s147
      %s171 = sphi 0, %s173
      %s174 = sphi 0, %s171
      %s175 = sphi 0, %s174
      %s191 = sphi 0, %s175
    $region4: #{tpu_custom_call.1} parent=1 // loop_header_branch
      %21 = sbr.rel (%p19) target = $region8
    $region5: #{tpu_custom_call.1} parent=1 // loop_body
      %s23 = ssub.s32 %s18, 1
      %s24 = ssub.s32 %s18, 2
      %s34 = sadd.s32 1, %s27
      %p35 = scmp.ge.s32.totalorder %s34, 1
      %s36 = scalar_select %p35, 0, %s34
      %s37 = sadd.s32 1, %s26
      %s38 = scalar_select %p35, %s37, %s26
      %p39 = scmp.ge.s32.totalorder %s38, 1
      %s40 = scalar_select %p39, 0, %s38
      %s41 = sadd.s32 1, %s25
      %s42 = scalar_select %p39, %s41, %s25
      %p43 = scmp.ge.s32.totalorder %s42, 2
      %s44 = scalar_select %p43, 0, %s42
      %s45 = ssub.s32 %s25, %s44
      %p46 = scmp.eq.s32.totalorder %s45, 0
      %s48 = sadd.s32 %s47, 1
      %s49 = scalar_select %p46, %s47, %s48
      %p52 = pneg %p46
      %p53 = scmp.eq.s32.totalorder %s18, 1
      %p54 = por %p52, %p53
      %p55 = scmp.ne.s32.totalorder %s47, %s50
      %p56 = scmp.eq.s32.totalorder %s18, 0
      %p57 = por %p55, %p56
      %p58 = scmp.ne.s32.totalorder %s47, %s50
      %p59 = scmp.eq.s32.totalorder %s23, 1
      %p60 = por %p58, %p59
      %p61 = scmp.ne.s32.totalorder %s50, %s51
      %p62 = scmp.eq.s32.totalorder %s23, 0
      %p63 = por %p61, %p62
      %p64 = scmp.ne.s32.totalorder %s50, %s51
      %p65 = scmp.eq.s32.totalorder %s24, 1
      %p66 = por %p64, %p65
      %p68 = scmp.ne.s32.totalorder %s51, %s67
      %p69 = scmp.eq.s32.totalorder %s24, 0
      %p70 = por %p68, %p69
      %s72 = sadd.s32 %s71, 1
      %p75 = scmp.eq.s32.totalorder %s18, 1
      %p76 = scmp.ne.s32.totalorder %s71, %s73
      %p77 = scmp.eq.s32.totalorder %s18, 0
      %p78 = por %p76, %p77
      %p79 = scmp.ne.s32.totalorder %s71, %s73
      %p80 = scmp.eq.s32.totalorder %s23, 1
      %p81 = por %p79, %p80
      %p82 = scmp.ne.s32.totalorder %s73, %s74
      %p83 = scmp.eq.s32.totalorder %s23, 0
      %p84 = por %p82, %p83
      %p85 = scmp.ne.s32.totalorder %s73, %s74
      %p86 = scmp.eq.s32.totalorder %s24, 1
      %p87 = por %p85, %p86
      %p89 = scmp.ne.s32.totalorder %s74, %s88
      %p90 = scmp.eq.s32.totalorder %s24, 0
      %p91 = por %p89, %p90
      %s93 = sadd.s32 %s92, 1
      %p96 = scmp.eq.s32.totalorder %s18, 1
      %p97 = scmp.ne.s32.totalorder %s92, %s94
      %p98 = scmp.eq.s32.totalorder %s18, 0
      %p99 = por %p97, %p98
      %p100 = scmp.ne.s32.totalorder %s92, %s94
      %p101 = scmp.eq.s32.totalorder %s23, 1
      %p102 = por %p100, %p101
      %p103 = scmp.ne.s32.totalorder %s94, %s95
      %p104 = scmp.eq.s32.totalorder %s23, 0
      %p105 = por %p103, %p104
      %p106 = scmp.ne.s32.totalorder %s94, %s95
      %p107 = scmp.eq.s32.totalorder %s24, 1
      %p108 = por %p106, %p107
      %p110 = scmp.ne.s32.totalorder %s95, %s109
      %p111 = scmp.eq.s32.totalorder %s24, 0
      %p112 = por %p110, %p111
      %s113 = ssub.s32 %s27, %s36
      %s114 = ssub.s32 %s26, %s40
      %s115 = sor.u32 %s113, %s114
      %p116 = scmp.eq.s32.totalorder %s115, 0
      %s118 = sadd.s32 %s117, 1
      %s119 = scalar_select %p116, %s117, %s118
      %p122 = pneg %p116
      %p123 = scmp.eq.s32.totalorder %s18, 1
      %p124 = por %p122, %p123
      %p125 = scmp.ne.s32.totalorder %s117, %s120
      %p126 = scmp.eq.s32.totalorder %s18, 0
      %p127 = por %p125, %p126
      %p128 = scmp.ne.s32.totalorder %s117, %s120
      %p129 = scmp.eq.s32.totalorder %s23, 1
      %p130 = por %p128, %p129
      %p131 = scmp.ne.s32.totalorder %s120, %s121
      %p132 = scmp.eq.s32.totalorder %s23, 0
      %p133 = por %p131, %p132
      %p134 = scmp.ne.s32.totalorder %s120, %s121
      %p135 = scmp.eq.s32.totalorder %s24, 1
      %p136 = por %p134, %p135
      %p138 = scmp.ne.s32.totalorder %s121, %s137
      %p139 = scmp.eq.s32.totalorder %s24, 0
      %p140 = por %p138, %p139
      %s141 = ssub.s32 %s26, %s40
      %p142 = scmp.eq.s32.totalorder %s141, 0
      %s144 = sadd.s32 %s143, 1
      %s145 = scalar_select %p142, %s143, %s144
      %p148 = pneg %p142
      %p149 = scmp.eq.s32.totalorder %s18, 1
      %p150 = por %p148, %p149
      %p151 = scmp.ne.s32.totalorder %s143, %s146
      %p152 = scmp.eq.s32.totalorder %s18, 0
      %p153 = por %p151, %p152
      %p154 = scmp.ne.s32.totalorder %s143, %s146
      %p155 = scmp.eq.s32.totalorder %s23, 1
      %p156 = por %p154, %p155
      %p157 = scmp.ne.s32.totalorder %s146, %s147
      %p158 = scmp.eq.s32.totalorder %s23, 0
      %p159 = por %p157, %p158
      %p160 = scmp.ne.s32.totalorder %s146, %s147
      %p161 = scmp.eq.s32.totalorder %s24, 1
      %p162 = por %p160, %p161
      %p164 = scmp.ne.s32.totalorder %s147, %s163
      %p165 = scmp.eq.s32.totalorder %s24, 0
      %p166 = por %p164, %p165
      %s167 = ssub.s32 %s25, %s44
      %s168 = ssub.s32 %s26, %s40
      %s169 = sor.u32 %s167, %s168
      %p170 = scmp.eq.s32.totalorder %s169, 0
      %s172 = sadd.s32 %s171, 1
      %s173 = scalar_select %p170, %s171, %s172
      %p176 = pneg %p170
      %p177 = scmp.eq.s32.totalorder %s18, 1
      %p178 = por %p176, %p177
      %p179 = scmp.ne.s32.totalorder %s171, %s174
      %p180 = scmp.eq.s32.totalorder %s18, 0
      %p181 = por %p179, %p180
      %p182 = scmp.ne.s32.totalorder %s171, %s174
      %p183 = scmp.eq.s32.totalorder %s23, 1
      %p184 = por %p182, %p183
      %p185 = scmp.ne.s32.totalorder %s174, %s175
      %p186 = scmp.eq.s32.totalorder %s23, 0
      %p187 = por %p185, %p186
      %p188 = scmp.ne.s32.totalorder %s174, %s175
      %p189 = scmp.eq.s32.totalorder %s24, 1
      %p190 = por %p188, %p189
      %p192 = scmp.ne.s32.totalorder %s175, %s191
      %p193 = scmp.eq.s32.totalorder %s24, 0
      %p194 = por %p192, %p193
      %p195 = scmp.le.s32.totalorder 1, %s18
      %p196 = scmp.lt.s32.totalorder %s18, 3
      %p197 = pnand %p195, %p196
      %p198 = pneg %p197
      // Predicated region
      $region9: #{tpu_custom_call.1} parent=5 // pred_check
        _
      $region10: #{tpu_custom_call.1} parent=5 // pred_check_branch
        %200 = sbr.rel (%p197) target = $region12
      $region11: #{tpu_custom_call.1} parent=5 // pred_region
        %s201 = ssub.s32 %s18, 1
        // Predicated region
        $region13: #{tpu_custom_call.1} parent=11 // pred_check
          %p202 = pneg %p84
        $region14: #{tpu_custom_call.1} parent=11 // pred_check_branch
          %204 = sbr.rel (%p202) target = $region16
        $region15: #{tpu_custom_call.1} parent=11 // pred_region
          _
        $region16: #{tpu_custom_call.1} parent=11 // pred_fallthru
          _
        // Predicated region
        $region17: #{tpu_custom_call.1} parent=11 // pred_check
          %p205 = pneg %p105
        $region18: #{tpu_custom_call.1} parent=11 // pred_check_branch
          %207 = sbr.rel (%p205) target = $region20
        $region19: #{tpu_custom_call.1} parent=11 // pred_region
          _
        $region20: #{tpu_custom_call.1} parent=11 // pred_fallthru
          _
        // Predicated region
        $region21: #{tpu_custom_call.1} parent=11 // pred_check
          %p208 = pneg %p133
        $region22: #{tpu_custom_call.1} parent=11 // pred_check_branch
          %210 = sbr.rel (%p208) target = $region24
        $region23: #{tpu_custom_call.1} parent=11 // pred_region
          %s211 = smul.u32 16, %s30
          %s213 = ssub.s32 2048, 2048
          %214 = vsyncadd [#allocation8], %s213
          %s215 = sadd.s32 %s29, %s211
          %s216 = smul.addr %s215, 128
          %s217 = scalar_lea.hbm %s3, %s216
          %s218 = sshll.u32 [#allocation7], 4
          %s219 = int_to_ptr.vmem [resolvable:$true] %s218
          %224 = dma.hbm_to_vmem [thread:$0]  %s217, 2048, %s219, [#allocation8], 128, 128, 8
        $region24: #{tpu_custom_call.1} parent=11 // pred_fallthru
          _
        // Predicated region
        $region25: #{tpu_custom_call.1} parent=11 // pred_check
          %p225 = pneg %p159
        $region26: #{tpu_custom_call.1} parent=11 // pred_check_branch
          %227 = sbr.rel (%p225) target = $region28
        $region27: #{tpu_custom_call.1} parent=11 // pred_region
          %p228 = scmp.lt.s32.totalorder %s29, 0
          %s229 = scalar_select %p228, %s29, 0
          %s230 = scalar_lea.vmem %s4, %s229
        $region28: #{tpu_custom_call.1} parent=11 // pred_fallthru
          _
      $region12: #{tpu_custom_call.1} parent=5 // pred_fallthru
        _
      %p231 = scmp.lt.s32.totalorder %s18, 2
      // Predicated region
      $region29: #{tpu_custom_call.1} parent=5 // pred_check
        %p232 = pneg %p231
      $region30: #{tpu_custom_call.1} parent=5 // pred_check_branch
        %234 = sbr.rel (%p232) target = $region32
      $region31: #{tpu_custom_call.1} parent=5 // pred_region
        // Predicated region
        $region33: #{tpu_custom_call.1} parent=31 // pred_check
          %p235 = pneg %p57
        $region34: #{tpu_custom_call.1} parent=31 // pred_check_branch
          %237 = sbr.rel (%p235) target = $region36
        $region35: #{tpu_custom_call.1} parent=31 // pred_region
          %s238 = sand.u32 %s47, 1
          %s239 = scalar_lea.sflag [#allocation5], %s238
          %s240 = sand.u32 %s47, 1
          %s241 = smul.addr %s240, 8
          %s242 = scalar_lea.vmem [#allocation4], %s241
          %s244 = ssub.s32 128, 128
          %245 = vsyncadd %s239, %s244
          %s246 = smul.addr %s25, 128
          %s247 = scalar_lea.hbm %s0, %s246
          %s249 = sshll.u32 %s242, 4
          %s250 = int_to_ptr.vmem [resolvable:$true] %s249
          %252 = dma.hbm_to_vmem [thread:$0]  %s247, 128, %s250, %s239
        $region36: #{tpu_custom_call.1} parent=31 // pred_fallthru
          _
      $region32: #{tpu_custom_call.1} parent=5 // pred_fallthru
        _
      %p253 = scmp.le.s32.totalorder 1, %s18
      %p254 = scmp.lt.s32.totalorder %s18, 3
      %p255 = pnand %p253, %p254
      %p256 = pneg %p255
      // Predicated region
      $region37: #{tpu_custom_call.1} parent=5 // pred_check
        _
      $region38: #{tpu_custom_call.1} parent=5 // pred_check_branch
        %258 = sbr.rel (%p255) target = $region40
      $region39: #{tpu_custom_call.1} parent=5 // pred_region
        %s259 = ssub.s32 %s18, 1
        %s260 = sand.u32 %s50, 1
        %s261 = scalar_lea.sflag [#allocation5], %s260
        %s262 = sand.u32 %s50, 1
        %s263 = smul.addr %s262, 8
        %s264 = scalar_lea.vmem [#allocation4], %s263
        // Predicated region
        $region41: #{tpu_custom_call.1} parent=39 // pred_check
          %p265 = pneg %p63
        $region42: #{tpu_custom_call.1} parent=39 // pred_check_branch
          %267 = sbr.rel (%p265) target = $region44
        $region43: #{tpu_custom_call.1} parent=39 // pred_region
          %268 = dma.done %s261, 128
        $region44: #{tpu_custom_call.1} parent=39 // pred_fallthru
          _
        // Predicated region
        $region45: #{tpu_custom_call.1} parent=39 // pred_check
          %p269 = pneg %p133
        $region46: #{tpu_custom_call.1} parent=39 // pred_check_branch
          %271 = sbr.rel (%p269) target = $region48
        $region47: #{tpu_custom_call.1} parent=39 // pred_region
          %272 = dma.done [#allocation8], 2048
        $region48: #{tpu_custom_call.1} parent=39 // pred_fallthru
          _
        %s273 = sand.u32 %s50, 1
        %s274 = scalar_lea.sflag [#allocation5], %s273
        %s275 = sand.u32 %s50, 1
        %s276 = smul.addr %s275, 8
        %s277 = scalar_lea.vmem [#allocation4], %s276
        %p278 = pneg %p63
        %p279 = pneg %p60
        %p280 = pneg %p84
        %p281 = pneg %p81
        %p282 = pneg %p105
        %p283 = pneg %p102
        %p284 = pneg %p133
        %p285 = pneg %p130
        %p286 = scmp.lt.s32.totalorder %s29, 0
        %s287 = scalar_select %p286, %s29, 0
        %s288 = scalar_lea.vmem %s4, %s287
        %p289 = pneg %p159
        %p290 = pneg %p156
        %p291 = pneg %p187
        %p292 = pneg %p184
        %s293 = sand.u32 %s174, 1
        %s294 = scalar_lea.sflag [#allocation6], %s293
        %s295 = sand.u32 %s174, 1
        %s296 = smul.addr %s295, 8
        %s297 = scalar_lea.vmem [#allocation9], %s296
        %s298 = smul.u32 16, %s30
        %p299 = scmp.lt.s32.totalorder %s29, 0
        %s300 = scalar_select %p299, %s29, 0
        %s301 = scalar_lea.vmem %s4, %s300
        %p302 = scmp.eq.s32.totalorder %s29, 0
        %p303 = scmp.eq.s32.totalorder %s30, 0
        %p304 = pnand %p302, %p303
        %p305 = pneg %p304
        // Predicated region
        $region49: #{tpu_custom_call.1} parent=39 // pred_check
          _
        $region50: #{tpu_custom_call.1} parent=39 // pred_check_branch
          %307 = sbr.rel (%p304) target = $region52
        $region51: #{tpu_custom_call.1} parent=39 // pred_region
          %v308 = vld [vmem:[%s264] sm:$0xff]
          %309 = vadd.xlane.f32.xlu0 %v308
          %v310 = vpop.xlane.xlu0 %309
          %v311 = vadd.f32 %v310, 0.0
          %v312 = vmul.f32 %v308, %v308
          %313 = vadd.xlane.f32.xlu0 %v312
          %v314 = vpop.xlane.xlu0 %313
          %v315 = vadd.f32 %v314, 0.0
          %v316 = vmul.f32 %v311, 0.03125
          %v317 = vmul.f32 %v315, 0.03125
          %v318 = vmul.f32 %v316, %v316
          %v319 = vsub.f32 %v317, %v318
          %v320 = vmax.f32 %v319, 0.0
          %v321 = vadd.f32 %v320, 1e-05
          %v322 = vrsqrt.pop %v321
          %v323 = vld [vmem:[%s1] sm:$0x1]
          %v324 = vld [vmem:[%s2] sm:$0x1]
          %v325 = vsub.f32 %v308, %v316
          %v326 = vmul.f32 %v325, %v322
          %v328 = vlaneseq
          %v329 = vshrl.u32 %v328, 7
          %v330 = vsub.s32 0, %v329
          %v331 = vrot.slane %v323, %v330
          %v333 = vmul.f32 %v326, %v331
          %v335 = vlaneseq
          %v336 = vshrl.u32 %v335, 7
          %v337 = vsub.s32 0, %v336
          %v338 = vrot.slane %v324, %v337
          %v340 = vadd.f32 %v333, %v338
          %341 = vst [vmem:[#allocation3] sm:$0xff] %v340
        $region52: #{tpu_custom_call.1} parent=39 // pred_fallthru
          _
        %s342 = smul.u32 %s30, 8
        %s343 = scalar_lea.vmem [#allocation3], %s342
        %v344 = vld [vmem:[%s343] sm:$0xff]
        // Predicated region
        $region53: #{tpu_custom_call.1} parent=39 // pred_check
          %p345 = pneg %p303
        $region54: #{tpu_custom_call.1} parent=39 // pred_check_branch
          %347 = sbr.rel (%p345) target = $region56
        $region55: #{tpu_custom_call.1} parent=39 // pred_region
          %348 = vst [vmem:[#allocation2] sm:$0xff] 0.0
        $region56: #{tpu_custom_call.1} parent=39 // pred_fallthru
          _
        %v349 = vld [vmem:[#allocation2] sm:$0xff]
        %v350 = vld [vmem:[#allocation7] sm:$0xff]
        %v351 = vld [vmem:[#allocation7 + $0x8] sm:$0xff]
        %v352 = vld [vmem:[#allocation7 + $0x10] sm:$0xff]
        %v353 = vld [vmem:[#allocation7 + $0x18] sm:$0xff]
        %v354 = vld [vmem:[#allocation7 + $0x20] sm:$0xff]
        %v355 = vld [vmem:[#allocation7 + $0x28] sm:$0xff]
        %v356 = vld [vmem:[#allocation7 + $0x30] sm:$0xff]
        %v357 = vld [vmem:[#allocation7 + $0x38] sm:$0xff]
        %v358 = vld [vmem:[#allocation7 + $0x40] sm:$0xff]
        %v359 = vld [vmem:[#allocation7 + $0x48] sm:$0xff]
        %v360 = vld [vmem:[#allocation7 + $0x50] sm:$0xff]
        %v361 = vld [vmem:[#allocation7 + $0x58] sm:$0xff]
        %v362 = vld [vmem:[#allocation7 + $0x60] sm:$0xff]
        %v363 = vld [vmem:[#allocation7 + $0x68] sm:$0xff]
        %v364 = vld [vmem:[#allocation7 + $0x70] sm:$0xff]
        %v365 = vld [vmem:[#allocation7 + $0x78] sm:$0xff]
        %366 = vmatprep.subr.mxu0 0.0
        %367 = vmatpush1.msra.mxu0 %v365
        %368 = vmatprep.subr.mxu0 0.0
        %369 = vmatpush1.msra.mxu0 %v364
        %370 = vmatprep.subr.mxu0 0.0
        %371 = vmatpush1.msra.mxu0 %v363
        %372 = vmatprep.subr.mxu0 0.0
        %373 = vmatpush1.msra.mxu0 %v362
        %374 = vmatprep.subr.mxu0 0.0
        %375 = vmatpush1.msra.mxu0 %v361
        %376 = vmatprep.subr.mxu0 0.0
        %377 = vmatpush1.msra.mxu0 %v360
        %378 = vmatprep.subr.mxu0 0.0
        %379 = vmatpush1.msra.mxu0 %v359
        %380 = vmatprep.subr.mxu0 0.0
        %381 = vmatpush1.msra.mxu0 %v358
        %382 = vmatprep.subr.mxu0 0.0
        %383 = vmatpush1.msra.mxu0 %v357
        %384 = vmatprep.subr.mxu0 0.0
        %385 = vmatpush1.msra.mxu0 %v356
        %386 = vmatprep.subr.mxu0 0.0
        %387 = vmatpush1.msra.mxu0 %v355
        %388 = vmatprep.subr.mxu0 0.0
        %389 = vmatpush1.msra.mxu0 %v354
        %390 = vmatprep.subr.mxu0 0.0
        %391 = vmatpush1.msra.mxu0 %v353
        %392 = vmatprep.subr.mxu0 0.0
        %393 = vmatpush1.msra.mxu0 %v352
        %394 = vmatprep.subr.mxu0 0.0
        %395 = vmatpush1.msra.mxu0 %v351
        %396 = vmatprep.subr.mxu0 0.0
        %397 = vmatpush1.msra.mxu0 %v350
        %398 = vmatprep.subr.mxu0 0.0
        %399 = vmatpush2.msra.mxu0 0.0
        %400 = vmatprep.subr.mxu0 0.0
        %401 = vmatpush2.msra.mxu0 0.0
        %402 = vmatprep.subr.mxu0 0.0
        %403 = vmatpush2.msra.mxu0 0.0
        %404 = vmatprep.subr.mxu0 0.0
        %405 = vmatpush2.msra.mxu0 0.0
        %406 = vmatprep.subr.mxu0 0.0
        %407 = vmatpush2.msra.mxu0 0.0
        %408 = vmatprep.subr.mxu0 0.0
        %409 = vmatpush2.msra.mxu0 0.0
        %410 = vmatprep.subr.mxu0 0.0
        %411 = vmatpush2.msra.mxu0 0.0
        %412 = vmatprep.subr.mxu0 0.0
        %413 = vmatpush2.msra.mxu0 0.0
        %414 = vmatprep.subr.mxu0 0.0
        %415 = vmatpush2.msra.mxu0 0.0
        %416 = vmatprep.subr.mxu0 0.0
        %417 = vmatpush2.msra.mxu0 0.0
        %418 = vmatprep.subr.mxu0 0.0
        %419 = vmatpush2.msra.mxu0 0.0
        %420 = vmatprep.subr.mxu0 0.0
        %421 = vmatpush2.msra.mxu0 0.0
        %422 = vmatprep.subr.mxu0 0.0
        %423 = vmatpush2.msra.mxu0 0.0
        %424 = vmatprep.subr.mxu0 0.0
        %425 = vmatpush2.msra.mxu0 0.0
        %426 = vmatprep.subr.mxu0 0.0
        %427 = vmatpush2.msra.mxu0 0.0
        %428 = vmatprep.subr.mxu0 0.0
        %429 = vmatpush2.msra.mxu0 0.0
        %430 = vmatprep.mubr.f32.mxu0 0.0
        %431 = vmatmul.mubr.f32.gmra.mxu0 %v344
        %v432 = vpop.f32.mrf.mxu0
        %v433 = vadd.f32 0.0, %v432
        %v434 = vpop.f32.mrf.mxu0
        %435 = vdwg.mxu0
        %v436 = vadd.f32 %v349, %v433
        %437 = vst [vmem:[#allocation2] sm:$0xff] %v436
        // Predicated region
        $region57: #{tpu_custom_call.1} parent=39 // pred_check
          %p438 = pneg %p303
        $region58: #{tpu_custom_call.1} parent=39 // pred_check_branch
          %440 = sbr.rel (%p438) target = $region60
        $region59: #{tpu_custom_call.1} parent=39 // pred_region
          %v441 = vld [vmem:[#allocation2] sm:$0xff]
          %v442 = vld [vmem:[%s301] sm:$0x1]
          %v444 = vlaneseq
          %v445 = vshrl.u32 %v444, 7
          %v446 = vsub.s32 0, %v445
          %v447 = vrot.slane %v442, %v446
          %v449 = vadd.f32 %v441, %v447
          %v450 = vmax.f32 %v449, 0.0
          %451 = vst [vmem:[%s297] sm:$0xff] %v450
        $region60: #{tpu_custom_call.1} parent=39 // pred_fallthru
          _
        %s452 = sand.u32 %s174, 1
        %s453 = scalar_lea.sflag [#allocation6], %s452
        %s454 = sand.u32 %s174, 1
        %s455 = smul.addr %s454, 8
        %s456 = scalar_lea.vmem [#allocation9], %s455
        // Predicated region
        $region61: #{tpu_custom_call.1} parent=39 // pred_check
          %p457 = pneg %p184
        $region62: #{tpu_custom_call.1} parent=39 // pred_check_branch
          %459 = sbr.rel (%p457) target = $region64
        $region63: #{tpu_custom_call.1} parent=39 // pred_region
          %s461 = ssub.s32 128, 128
          %462 = vsyncadd %s453, %s461
          %s463 = sadd.s32 %s29, %s28
          %s464 = smul.addr %s463, 128
          %s465 = scalar_lea.hbm %s5, %s464
          %s467 = sshll.u32 %s456, 4
          %s468 = int_to_ptr.vmem [resolvable:$true] %s467
          %470 = dma.vmem_to_hbm [thread:$0]  %s468, 128, %s465, %s453
        $region64: #{tpu_custom_call.1} parent=39 // pred_fallthru
          _
      $region40: #{tpu_custom_call.1} parent=5 // pred_fallthru
        _
      %p471 = scmp.le.s32.totalorder 2, %s18
      // Predicated region
      $region65: #{tpu_custom_call.1} parent=5 // pred_check
        %p472 = pneg %p471
      $region66: #{tpu_custom_call.1} parent=5 // pred_check_branch
        %474 = sbr.rel (%p472) target = $region68
      $region67: #{tpu_custom_call.1} parent=5 // pred_region
        %s475 = ssub.s32 %s18, 2
        // Predicated region
        $region69: #{tpu_custom_call.1} parent=67 // pred_check
          %p476 = pneg %p190
        $region70: #{tpu_custom_call.1} parent=67 // pred_check_branch
          %478 = sbr.rel (%p476) target = $region72
        $region71: #{tpu_custom_call.1} parent=67 // pred_region
          %s479 = sand.u32 %s175, 1
          %s480 = scalar_lea.sflag [#allocation6], %s479
          %s481 = sand.u32 %s175, 1
          %s482 = smul.addr %s481, 8
          %s483 = scalar_lea.vmem [#allocation9], %s482
          %484 = dma.done %s480, 128
        $region72: #{tpu_custom_call.1} parent=67 // pred_fallthru
          _
      $region68: #{tpu_custom_call.1} parent=5 // pred_fallthru
        _
    $region6: #{tpu_custom_call.1} parent=1 // loop_footer
      %s22 = sadd.s32 1, %s18
    $region7: #{tpu_custom_call.1} parent=1 // loop_footer_branch
      %17 = sbr.rel target = $region3
    $region8: #{tpu_custom_call.1} parent=1 // loop_exit
      _
    %485 = vsyncpa [#allocation5], 1
    %s486 = scalar_lea.sflag [#allocation5], 1
    %487 = vsyncpa %s486, 1
    %488 = vsyncpa [#allocation8], 1
    %489 = vsyncpa [#allocation6], 1
    %s490 = scalar_lea.sflag [#allocation6], 1
    %491 = vsyncpa %s490, 1

</llo_original>
